<compile_context>
chip_gen: v7x
topology: tpu7x:2x2x1
jax: 0.10.0
libtpu: 0.0.40
codegen_flags: <defaults>
</compile_context>

<pallas_src>
import functools
import math

import numpy as np
import jax
import jax.numpy as jnp
from jax.experimental import pallas as pl
from jax.experimental.pallas import tpu as pltpu


_PACK = 64        # graphs per packed row -> packed_feat = 64*6*GL = 384*GL (% 128 == 0)
_NUM_CORES = 2    # leading "parallel" grid axis (v7x megacore; serial on v5e/v6e)
_ROW_ALIGN = 32   # row-tile granularity (safe sublane tiling for f32/bf16/int8)
_SHIFT = 6        # lane distance between consecutive nodes' features


def _round_up(a, b):
    return -(-a // b) * b


def _last_node_shift_loss_kernel(pred_ref, target_ref, w_ref, out_ref, acc_ref,
                                 *, packed_feat, tile, inv_norm):
    step = pl.program_id(1)
    width = packed_feat - _SHIFT

    @pl.when(step == 0)
    def _():
        acc_ref[...] = jnp.zeros_like(acc_ref)

    def body(k, carry):
        r0 = pl.multiple_of(k * 8, 8)
        p = pred_ref[pl.ds(r0, 8), :].astype(jnp.float32)   # (8, packed_feat)
        t = target_ref[pl.ds(r0, 8), :].astype(jnp.float32)
        d = p - t
        # e[:, j] = d[:, j+6] - d[:, j]  (node k+1 minus node k differences)
        e = d[:, _SHIFT:] - d[:, :width]
        return carry + e * e

    partial = jax.lax.fori_loop(0, tile // 8, body,
                                jnp.zeros((8, width), jnp.float32))
    acc_ref[...] = acc_ref[...] + partial

    @pl.when(step == pl.num_programs(1) - 1)
    def _():
        # Single weighted cross-lane/cross-sublane reduction, once per core.
        total = jnp.sum(acc_ref[...] * w_ref[...])
        out_ref[...] = jnp.reshape(total * jnp.float32(inv_norm), (1, 1))


def last_node_shift_loss(pred, target, *, graph_length=5, alpha=20.0,
                         max_rows_per_step=1024):
    """Pallas implementation of LastNodeShiftLoss.forward (scalar f32 loss)."""
    assert pred.shape == target.shape, "pred and target should have the same shape."
    assert graph_length >= 2
    feat = graph_length * 6
    total = math.prod(pred.shape)
    assert total % feat == 0
    n = total // feat                               # true number of graphs
    packed_feat = _PACK * feat                      # 384*GL, multiple of 128

    # Row tiling: split rows across the 2-entry "parallel" axis, then into
    # "arbitrary" steps of `tile` rows.  Zero-padded graphs/rows contribute 0.
    rows_min = max(1, -(-total // packed_feat))
    tile_cap = max(_ROW_ALIGN, _ROW_ALIGN * (int(max_rows_per_step) // _ROW_ALIGN))
    if rows_min <= _NUM_CORES * tile_cap:
        tile = _round_up(-(-rows_min // _NUM_CORES), _ROW_ALIGN)
        steps = 1
    else:
        tile = tile_cap
        steps = -(-rows_min // (_NUM_CORES * tile))
    rows_padded = _NUM_CORES * steps * tile
    padded_elems = rows_padded * packed_feat

    pred_flat = pred.reshape(-1)
    target_flat = target.reshape(-1)
    if padded_elems != total:
        pad = padded_elems - total
        pred_flat = jnp.pad(pred_flat, (0, pad))
        target_flat = jnp.pad(target_flat, (0, pad))
    pred_pk = pred_flat.reshape(rows_padded, packed_feat)
    target_pk = target_flat.reshape(rows_padded, packed_feat)

    # Hoisted lane-weight row: e[:, j] = d[:, j+6] - d[:, j], so each graph's
    # (last - second_last) error sits at its second-last node's lane offsets.
    width = packed_feat - _SHIFT
    pos_in_graph = np.arange(width) % feat
    sec0 = (graph_length - 2) * 6
    w_row = np.where((pos_in_graph >= sec0) & (pos_in_graph < sec0 + 3), 1.0,
                     np.where((pos_in_graph >= sec0 + 3) & (pos_in_graph < sec0 + 6),
                              float(alpha), 0.0)).astype(np.float32)
    w_arr = jnp.asarray(np.tile(w_row[None, :], (8, 1)))

    inv_norm = 1.0 / (3.0 * n)                      # global normalizer (true N)
    kernel = functools.partial(_last_node_shift_loss_kernel,
                               packed_feat=packed_feat, tile=tile,
                               inv_norm=float(inv_norm))

    itemsize = jnp.dtype(pred.dtype).itemsize
    per_buf = tile * packed_feat * itemsize
    # 2 inputs x 2 pipeline buffers + headroom for slab temps; cap at 48 MB
    # so the request also fits v7x's 64 MiB physical VMEM.
    vmem_limit = int(max(32 * 2**20, min(48 * 2**20, 4 * per_buf + 8 * 2**20)))

    out = pl.pallas_call(
        kernel,
        out_shape=jax.ShapeDtypeStruct((_NUM_CORES, 1, 1), jnp.float32),
        grid_spec=pltpu.PrefetchScalarGridSpec(
            num_scalar_prefetch=0,
            grid=(_NUM_CORES, steps),
            in_specs=[
                pl.BlockSpec((tile, packed_feat), lambda c, i: (c * steps + i, 0)),
                pl.BlockSpec((tile, packed_feat), lambda c, i: (c * steps + i, 0)),
                pl.BlockSpec((8, width), lambda c, i: (0, 0)),
            ],
            out_specs=pl.BlockSpec((None, 1, 1), lambda c, i: (c, 0, 0)),
            scratch_shapes=[pltpu.VMEM((8, width), jnp.float32)],
        ),
        compiler_params=pltpu.CompilerParams(
            dimension_semantics=("parallel", "arbitrary"),
            vmem_limit_bytes=vmem_limit,
        ),
        cost_estimate=pl.CostEstimate(
            flops=5 * rows_padded * packed_feat,
            transcendentals=0,
            bytes_accessed=(2 * rows_padded * packed_feat * itemsize
                            + 8 * width * 4 + _NUM_CORES * 4),
        ),
    )(pred_pk, target_pk, w_arr)
    # Sum the (up to) two per-core partial losses (each already normalized).
    return jnp.sum(out)


def _reference_loss(pred, target, *, graph_length=5, alpha=20.0):
    pred = pred.reshape(-1, graph_length, 6).astype(jnp.float32)
    target = target.reshape(-1, graph_length, 6).astype(jnp.float32)
    dp = pred[:, -1, :] - pred[:, -2, :]
    dt = target[:, -1, :] - target[:, -2, :]
    pos = jnp.mean((dp[:, :3] - dt[:, :3]) ** 2)
    rot = jnp.mean((dp[:, 3:] - dt[:, 3:]) ** 2)
    return pos + rot * alpha


if __name__ == "__main__":
    key = jax.random.PRNGKey(0)
    k1, k2, k3, k4 = jax.random.split(key, 4)
    graph_length = 5
    alpha = 20.0

    # Case 1: tiny batch -> single grid step per core, heavy row/pack padding.
    batch = 8
    pred = jax.random.normal(k1, (batch, graph_length, 6), dtype=jnp.float32)
    target = jax.random.normal(k2, (batch, graph_length, 6), dtype=jnp.float32)
    loss = jax.block_until_ready(
        last_node_shift_loss(pred, target, graph_length=graph_length, alpha=alpha))
    ref = _reference_loss(pred, target, graph_length=graph_length, alpha=alpha)
    assert jnp.allclose(loss, ref, rtol=1e-4, atol=1e-4), (loss, ref)

    # Case 2: larger batch exercising the multi-step "arbitrary" axis, the
    # two-core row split and the pack-tail padding (4500 % 64 != 0).
    batch2 = 4500
    pred2 = jax.random.normal(k3, (batch2, graph_length, 6), dtype=jnp.float32)
    target2 = jax.random.normal(k4, (batch2, graph_length, 6), dtype=jnp.float32)
    loss2 = jax.block_until_ready(
        last_node_shift_loss(pred2, target2, graph_length=graph_length,
                             alpha=alpha, max_rows_per_step=32))
    ref2 = _reference_loss(pred2, target2, graph_length=graph_length, alpha=alpha)
    assert jnp.allclose(loss2, ref2, rtol=1e-4, atol=1e-4), (loss2, ref2)

    # Case 3: bf16 inputs (per-slab cast inside the kernel).
    pred_bf = pred.astype(jnp.bfloat16)
    target_bf = target.astype(jnp.bfloat16)
    loss3 = jax.block_until_ready(
        last_node_shift_loss(pred_bf, target_bf, graph_length=graph_length,
                             alpha=alpha))
    ref3 = _reference_loss(pred_bf, target_bf, graph_length=graph_length,
                           alpha=alpha)
    assert jnp.allclose(loss3, ref3, rtol=5e-3, atol=5e-3), (loss3, ref3)

    print("KERNEL_OK")
</pallas_src>

<mosaic_0001>
module attributes {stable_mosaic.version = 11 : i64} {
  func.func @_last_node_shift_loss_kernel(%arg0: i32, %arg1: i32, %arg2: memref<32x1920xf32, #tpu.memory_space<vmem>>, %arg3: memref<32x1920xf32, #tpu.memory_space<vmem>>, %arg4: memref<8x1914xf32, #tpu.memory_space<vmem>>, %arg5: memref<1x1x1xf32, #tpu.memory_space<vmem>>, %arg6: memref<8x1914xf32, #tpu.memory_space<vmem>>) attributes {dimension_semantics = [#tpu.dimension_semantics<parallel>, #tpu.dimension_semantics<arbitrary>], iteration_bounds = array<i64: 2, 1>, scalar_prefetch = 0 : i64, scratch_operands = 1 : i64, tpu.core_type = #tpu.core_type<tc>, window_params = [{transform_indices = @transform_0, window_bounds = array<i64: 32, 1920>}, {transform_indices = @transform_1, window_bounds = array<i64: 32, 1920>}, {pipeline_mode = #tpu.pipeline_mode<synchronous>, transform_indices = @transform_2, window_bounds = array<i64: 8, 1914>}, {transform_indices = @transform_3, window_bounds = array<i64: 1, 1, 1>}]} {
    %c0_i32 = arith.constant 0 : i32
    %0 = arith.cmpi eq, %arg1, %c0_i32 : i32
    %1 = arith.extui %0 : i1 to i32
    %c0_i32_0 = arith.constant 0 : i32
    %2 = arith.cmpi ne, %1, %c0_i32_0 : i32
    scf.if %2 {
      %cst_8 = arith.constant 0.000000e+00 : f32
      %12 = vector.broadcast %cst_8 : f32 to vector<8x1914xf32>
      %c0_9 = arith.constant 0 : index
      %c0_10 = arith.constant 0 : index
      %13 = vector.load %arg6[%c0_9, %c0_10] : memref<8x1914xf32, #tpu.memory_space<vmem>>, vector<8x1914xf32>
      tpu.vector_store %arg6[%c0_9, %c0_10], %12 {strides = array<i32>} : memref<8x1914xf32, #tpu.memory_space<vmem>>, vector<8x1914xf32>,
    } else {
    }
    %cst = arith.constant 0.000000e+00 : f32
    %3 = vector.broadcast %cst : f32 to vector<8x1914xf32>
    %c0_i32_1 = arith.constant 0 : i32
    %c4_i32 = arith.constant 4 : i32
    %4 = arith.addi %c0_i32_1, %c4_i32 : i32
    %c1_i32 = arith.constant 1 : i32
    %5 = scf.for %arg7 = %c0_i32_1 to %4 step %c1_i32 iter_args(%arg8 = %3) -> (vector<8x1914xf32>)  : i32 {
      %c8_i32 = arith.constant 8 : i32
      %12 = arith.muli %arg7, %c8_i32 : i32
      %13 = tpu.assume_multiple %12, 8 : i32
      %14 = arith.index_cast %13 : i32 to index
      %c0_8 = arith.constant 0 : index
      %15 = vector.load %arg2[%14, %c0_8] : memref<32x1920xf32, #tpu.memory_space<vmem>>, vector<8x1920xf32>
      %16 = arith.index_cast %13 : i32 to index
      %c0_9 = arith.constant 0 : index
      %17 = vector.load %arg3[%16, %c0_9] : memref<32x1920xf32, #tpu.memory_space<vmem>>, vector<8x1920xf32>
      %18 = arith.subf %15, %17 : vector<8x1920xf32>
      %19 = vector.extract_strided_slice %18 {offsets = [0, 6], sizes = [8, 1914], strides = [1, 1]} : vector<8x1920xf32> to vector<8x1914xf32>
      %20 = vector.extract_strided_slice %18 {offsets = [0, 0], sizes = [8, 1914], strides = [1, 1]} : vector<8x1920xf32> to vector<8x1914xf32>
      %21 = arith.subf %19, %20 : vector<8x1914xf32>
      %22 = arith.mulf %21, %21 : vector<8x1914xf32>
      %23 = arith.addf %arg8, %22 : vector<8x1914xf32>
      scf.yield %23 : vector<8x1914xf32>
    }
    %c4_i32_2 = arith.constant 4 : i32
    %c0 = arith.constant 0 : index
    %c0_3 = arith.constant 0 : index
    %6 = vector.load %arg6[%c0, %c0_3] : memref<8x1914xf32, #tpu.memory_space<vmem>>, vector<8x1914xf32>
    %7 = arith.addf %6, %5 : vector<8x1914xf32>
    %c0_4 = arith.constant 0 : index
    %c0_5 = arith.constant 0 : index
    %8 = vector.load %arg6[%c0_4, %c0_5] : memref<8x1914xf32, #tpu.memory_space<vmem>>, vector<8x1914xf32>
    tpu.vector_store %arg6[%c0_4, %c0_5], %7 {strides = array<i32>} : memref<8x1914xf32, #tpu.memory_space<vmem>>, vector<8x1914xf32>,
    %c0_i32_6 = arith.constant 0 : i32
    %9 = arith.cmpi eq, %arg1, %c0_i32_6 : i32
    %10 = arith.extui %9 : i1 to i32
    %c0_i32_7 = arith.constant 0 : i32
    %11 = arith.cmpi ne, %10, %c0_i32_7 : i32
    scf.if %11 {
      %c0_8 = arith.constant 0 : index
      %c0_9 = arith.constant 0 : index
      %12 = vector.load %arg6[%c0_8, %c0_9] : memref<8x1914xf32, #tpu.memory_space<vmem>>, vector<8x1914xf32>
      %c0_10 = arith.constant 0 : index
      %c0_11 = arith.constant 0 : index
      %13 = vector.load %arg4[%c0_10, %c0_11] : memref<8x1914xf32, #tpu.memory_space<vmem>>, vector<8x1914xf32>
      %14 = arith.mulf %12, %13 : vector<8x1914xf32>
      %15 = vector.shape_cast %14 : vector<8x1914xf32> to vector<1x8x1914xf32>
      %cst_12 = arith.constant dense<0.000000e+00> : vector<1xf32>
      %16 = vector.multi_reduction <add>, %15, %cst_12 [1, 2] : vector<1x8x1914xf32> to vector<1xf32>
      %17 = vector.shape_cast %16 : vector<1xf32> to vector<1x1x1xf32>
      %18 = vector.extract %17[0, 0, 0] : f32 from vector<1x1x1xf32>
      %cst_13 = arith.constant 0.0416666679 : f32
      %19 = arith.mulf %18, %cst_13 : f32
      %20 = vector.broadcast %19 : f32 to vector<1x1xf32>
      %c0_14 = arith.constant 0 : index
      %c0_15 = arith.constant 0 : index
      %c0_16 = arith.constant 0 : index
      %21 = vector.load %arg5[%c0_14, %c0_15, %c0_16] : memref<1x1x1xf32, #tpu.memory_space<vmem>>, vector<1x1x1xf32>
      %22 = vector.shape_cast %21 : vector<1x1x1xf32> to vector<1x1xf32>
      %23 = vector.shape_cast %20 : vector<1x1xf32> to vector<1x1x1xf32>
      tpu.vector_store %arg5[%c0_14, %c0_15, %c0_16], %23 {strides = array<i32>} : memref<1x1x1xf32, #tpu.memory_space<vmem>>, vector<1x1x1xf32>,
    } else {
    }
    return
  }
  func.func @transform_0(%arg0: i32, %arg1: i32) -> (i32, i32) {
    %c1_i32 = arith.constant 1 : i32
    %0 = arith.muli %arg0, %c1_i32 : i32
    %1 = arith.addi %0, %arg1 : i32
    %c0_i32 = arith.constant 0 : i32
    %c0_i32_0 = arith.constant 0 : i32
    return %1, %c0_i32 : i32, i32
  }
  func.func @transform_1(%arg0: i32, %arg1: i32) -> (i32, i32) {
    %c1_i32 = arith.constant 1 : i32
    %0 = arith.muli %arg0, %c1_i32 : i32
    %1 = arith.addi %0, %arg1 : i32
    %c0_i32 = arith.constant 0 : i32
    %c0_i32_0 = arith.constant 0 : i32
    return %1, %c0_i32 : i32, i32
  }
  func.func @transform_2(%arg0: i32, %arg1: i32) -> (i32, i32) {
    %c0_i32 = arith.constant 0 : i32
    %c0_i32_0 = arith.constant 0 : i32
    %c0_i32_1 = arith.constant 0 : i32
    return %c0_i32, %c0_i32_0 : i32, i32
  }
  func.func @transform_3(%arg0: i32, %arg1: i32) -> (i32, i32, i32) {
    %c0_i32 = arith.constant 0 : i32
    %c0_i32_0 = arith.constant 0 : i32
    %c0_i32_1 = arith.constant 0 : i32
    return %arg0, %c0_i32, %c0_i32_0 : i32, i32, i32
  }
}

</mosaic_0001>

<llo_original>
// kernel: tpu_custom_call.1
$region0: #{tpu_custom_call.1}
  #allocation0 [shape = 'u32[]', space=smem, size = 0x4, offset = 0x4, fixed_abs, tag = 'smem constant byte address 0x4 - core index']
  #allocation1 [shape = 'u32[144,128]{1,0:T(1,128)}', space=vmem, size = 0x12000, scoped, tag = 'internal scratch']
  #allocation2 [shape = 'f32[8,1914]{1,0:T(8,128)}', space=vmem, size = 0xf000, scoped, tag = 'scratch operand']
  %s0 = inlined_call_operand.hbm [shape: f32[64,1920], index: 0, kind: input, shape index: {}]
  %s1 = inlined_call_operand.hbm [shape: f32[64,1920], index: 1, kind: input, shape index: {}]
  %s2 = inlined_call_operand.hbm [shape: f32[8,1914], index: 2, kind: input, shape index: {}]
  %s3 = inlined_call_operand.vmem [shape: f32[2,1,1], index: 3, kind: output, shape index: {}]
  %s4 = sld [smem:[#allocation0]]
  $region72: #{tpu_custom_call.1} parent=0
    _
  %s6 = ssub.s32 1, %s4
  %s7 = scalar_select 0, %s6, %s4
  $region1: #{tpu_custom_call.1} parent=0
    #allocation3 [shape = 'u8[491520]{0}', space=vmem, size = 0x78000, scoped, tag = 'input window, operand 0']
    #allocation4 [shape = 's32[2]{0}', space=sflag, size = 0x8, scoped, tag = 'scoped memory for tpu_custom_call.1']
    #allocation5 [shape = 'u8[491520]{0}', space=vmem, size = 0x78000, scoped, tag = 'input window, operand 1']
    #allocation6 [shape = 's32[2]{0}', space=sflag, size = 0x8, scoped, tag = 'scoped memory for tpu_custom_call.1']
    #allocation7 [shape = 'u8[61440]{0}', space=vmem, size = 0xf000, scoped, tag = 'input window, operand 2, single buffered']
    %8 = vsyncpa [#allocation4], 0
    %s9 = scalar_lea.sflag [#allocation4], 1
    %10 = vsyncpa %s9, 0
    %11 = vsyncpa [#allocation6], 0
    %s12 = scalar_lea.sflag [#allocation6], 1
    %13 = vsyncpa %s12, 0
    loop: start=0, step=1, limit=4
    $region2: #{tpu_custom_call.1} parent=1 // loop_pre_header
      _
    $region3: #{tpu_custom_call.1} parent=1 // loop_header
      %s15 = sphi 0, %s19
      %p16 = scmp.ge.s32.totalorder %s15, 4
      %s22 = sphi 0, %s34
      %s23 = sphi 0, %s30
      %s24 = sphi 0, %s22
      %s25 = sphi 0, %s23
      %s26 = sphi 0, %s24
      %s27 = sphi 0, %s25
      %s39 = sphi 0, %s41
      %s42 = sphi 0, %s39
      %s43 = sphi 0, %s42
      %s59 = sphi 0, %s43
      %s67 = sphi 0, %s69
      %s70 = sphi 0, %s67
      %s71 = sphi 0, %s70
      %s87 = sphi 0, %s71
      %s91 = sphi 0, %s91
      %s93 = sphi 0, %s91
      %s94 = sphi 0, %s93
      %s108 = sphi 0, %s94
      %s114 = sphi 0, %s116
      %s117 = sphi 0, %s114
      %s118 = sphi 0, %s117
      %s134 = sphi 0, %s118
    $region4: #{tpu_custom_call.1} parent=1 // loop_header_branch
      %18 = sbr.rel (%p16) target = $region8
    $region5: #{tpu_custom_call.1} parent=1 // loop_body
      %s20 = ssub.s32 %s15, 1
      %s21 = ssub.s32 %s15, 2
      %s28 = sadd.s32 1, %s23
      %p29 = scmp.ge.s32.totalorder %s28, 1
      %s30 = scalar_select %p29, 0, %s28
      %s31 = sadd.s32 1, %s22
      %s32 = scalar_select %p29, %s31, %s22
      %p33 = scmp.ge.s32.totalorder %s32, 2
      %s34 = scalar_select %p33, 0, %s32
      %s35 = sadd.s32 %s22, %s23
      %s36 = sadd.s32 %s34, %s30
      %s37 = ssub.s32 %s35, %s36
      %p38 = scmp.eq.s32.totalorder %s37, 0
      %s40 = sadd.s32 %s39, 1
      %s41 = scalar_select %p38, %s39, %s40
      %p44 = pneg %p38
      %p45 = scmp.eq.s32.totalorder %s15, 1
      %p46 = por %p44, %p45
      %p47 = scmp.ne.s32.totalorder %s39, %s42
      %p48 = scmp.eq.s32.totalorder %s15, 0
      %p49 = por %p47, %p48
      %p50 = scmp.ne.s32.totalorder %s39, %s42
      %p51 = scmp.eq.s32.totalorder %s20, 1
      %p52 = por %p50, %p51
      %p53 = scmp.ne.s32.totalorder %s42, %s43
      %p54 = scmp.eq.s32.totalorder %s20, 0
      %p55 = por %p53, %p54
      %p56 = scmp.ne.s32.totalorder %s42, %s43
      %p57 = scmp.eq.s32.totalorder %s21, 1
      %p58 = por %p56, %p57
      %p60 = scmp.ne.s32.totalorder %s43, %s59
      %p61 = scmp.eq.s32.totalorder %s21, 0
      %p62 = por %p60, %p61
      %s63 = sadd.s32 %s22, %s23
      %s64 = sadd.s32 %s34, %s30
      %s65 = ssub.s32 %s63, %s64
      %p66 = scmp.eq.s32.totalorder %s65, 0
      %s68 = sadd.s32 %s67, 1
      %s69 = scalar_select %p66, %s67, %s68
      %p72 = pneg %p66
      %p73 = scmp.eq.s32.totalorder %s15, 1
      %p74 = por %p72, %p73
      %p75 = scmp.ne.s32.totalorder %s67, %s70
      %p76 = scmp.eq.s32.totalorder %s15, 0
      %p77 = por %p75, %p76
      %p78 = scmp.ne.s32.totalorder %s67, %s70
      %p79 = scmp.eq.s32.totalorder %s20, 1
      %p80 = por %p78, %p79
      %p81 = scmp.ne.s32.totalorder %s70, %s71
      %p82 = scmp.eq.s32.totalorder %s20, 0
      %p83 = por %p81, %p82
      %p84 = scmp.ne.s32.totalorder %s70, %s71
      %p85 = scmp.eq.s32.totalorder %s21, 1
      %p86 = por %p84, %p85
      %p88 = scmp.ne.s32.totalorder %s71, %s87
      %p89 = scmp.eq.s32.totalorder %s21, 0
      %p90 = por %p88, %p89
      %s92 = sadd.s32 %s91, 1
      %p95 = scmp.eq.s32.totalorder %s15, 1
      %p96 = scmp.ne.s32.totalorder %s91, %s93
      %p97 = scmp.eq.s32.totalorder %s15, 0
      %p98 = por %p96, %p97
      %p99 = scmp.ne.s32.totalorder %s91, %s93
      %p100 = scmp.eq.s32.totalorder %s20, 1
      %p101 = por %p99, %p100
      %p102 = scmp.ne.s32.totalorder %s93, %s94
      %p103 = scmp.eq.s32.totalorder %s20, 0
      %p104 = por %p102, %p103
      %p105 = scmp.ne.s32.totalorder %s93, %s94
      %p106 = scmp.eq.s32.totalorder %s21, 1
      %p107 = por %p105, %p106
      %p109 = scmp.ne.s32.totalorder %s94, %s108
      %p110 = scmp.eq.s32.totalorder %s21, 0
      %p111 = por %p109, %p110
      %s112 = ssub.s32 %s22, %s34
      %p113 = scmp.eq.s32.totalorder %s112, 0
      %s115 = sadd.s32 %s114, 1
      %s116 = scalar_select %p113, %s114, %s115
      %p119 = pneg %p113
      %p120 = scmp.eq.s32.totalorder %s15, 1
      %p121 = por %p119, %p120
      %p122 = scmp.ne.s32.totalorder %s114, %s117
      %p123 = scmp.eq.s32.totalorder %s15, 0
      %p124 = por %p122, %p123
      %p125 = scmp.ne.s32.totalorder %s114, %s117
      %p126 = scmp.eq.s32.totalorder %s20, 1
      %p127 = por %p125, %p126
      %p128 = scmp.ne.s32.totalorder %s117, %s118
      %p129 = scmp.eq.s32.totalorder %s20, 0
      %p130 = por %p128, %p129
      %p131 = scmp.ne.s32.totalorder %s117, %s118
      %p132 = scmp.eq.s32.totalorder %s21, 1
      %p133 = por %p131, %p132
      %p135 = scmp.ne.s32.totalorder %s118, %s134
      %p136 = scmp.eq.s32.totalorder %s21, 0
      %p137 = por %p135, %p136
      %p138 = scmp.le.s32.totalorder 1, %s15
      %p139 = scmp.lt.s32.totalorder %s15, 3
      %p140 = pnand %p138, %p139
      %p141 = pneg %p140
      // Predicated region
      $region9: #{tpu_custom_call.1} parent=5 // pred_check
        _
      $region10: #{tpu_custom_call.1} parent=5 // pred_check_branch
        %143 = sbr.rel (%p140) target = $region12
      $region11: #{tpu_custom_call.1} parent=5 // pred_region
        %s144 = ssub.s32 %s15, 1
        // Predicated region
        $region13: #{tpu_custom_call.1} parent=11 // pred_check
          %p145 = pneg %p104
        $region14: #{tpu_custom_call.1} parent=11 // pred_check_branch
          %147 = sbr.rel (%p145) target = $region16
        $region15: #{tpu_custom_call.1} parent=11 // pred_region
          %s149 = ssub.s32 1920, 1920
          %150 = vsyncadd [#allocation6], %s149
          %s152 = sshll.u32 [#allocation7], 4
          %s153 = int_to_ptr.vmem [resolvable:$true] %s152
          %155 = dma.hbm_to_vmem [thread:$0]  %s2, 1920, %s153, [#allocation6]
        $region16: #{tpu_custom_call.1} parent=11 // pred_fallthru
          _
      $region12: #{tpu_custom_call.1} parent=5 // pred_fallthru
        _
      %p156 = scmp.lt.s32.totalorder %s15, 2
      // Predicated region
      $region17: #{tpu_custom_call.1} parent=5 // pred_check
        %p157 = pneg %p156
      $region18: #{tpu_custom_call.1} parent=5 // pred_check_branch
        %159 = sbr.rel (%p157) target = $region20
      $region19: #{tpu_custom_call.1} parent=5 // pred_region
        // Predicated region
        $region21: #{tpu_custom_call.1} parent=19 // pred_check
          %p160 = pneg %p49
        $region22: #{tpu_custom_call.1} parent=19 // pred_check_branch
          %162 = sbr.rel (%p160) target = $region24
        $region23: #{tpu_custom_call.1} parent=19 // pred_region
          %s163 = sand.u32 %s39, 1
          %s164 = scalar_lea.sflag [#allocation4], %s163
          %s165 = sand.u32 %s39, 1
          %s166 = smul.addr %s165, 480
          %s167 = scalar_lea.vmem [#allocation3], %s166
          %s168 = sadd.s32 %s22, %s23
          %s169 = smul.u32 4, %s168
          %s171 = ssub.s32 7680, 7680
          %172 = vsyncadd %s164, %s171
          %s173 = smul.addr %s169, 15
          %s174 = smul.addr %s173, 128
          %s175 = scalar_lea.hbm %s0, %s174
          %s176 = sshll.u32 %s167, 4
          %s177 = int_to_ptr.vmem [resolvable:$true] %s176
          %182 = dma.hbm_to_vmem [thread:$0]  %s175, 7680, %s177, %s164, 1920, 1920, 120
        $region24: #{tpu_custom_call.1} parent=19 // pred_fallthru
          _
        // Predicated region
        $region25: #{tpu_custom_call.1} parent=19 // pred_check
          %p183 = pneg %p77
        $region26: #{tpu_custom_call.1} parent=19 // pred_check_branch
          %185 = sbr.rel (%p183) target = $region28
        $region27: #{tpu_custom_call.1} parent=19 // pred_region
          %s186 = sand.u32 %s15, 1
          %s187 = scalar_lea.sflag [#allocation6], %s186
          %s188 = sand.u32 %s67, 1
          %s189 = smul.addr %s188, 480
          %s190 = scalar_lea.vmem [#allocation5], %s189
          %s191 = sadd.s32 %s22, %s23
          %s192 = smul.u32 4, %s191
          %s194 = ssub.s32 7680, 7680
          %195 = vsyncadd %s187, %s194
          %s196 = smul.addr %s192, 15
          %s197 = smul.addr %s196, 128
          %s198 = scalar_lea.hbm %s1, %s197
          %s199 = sshll.u32 %s190, 4
          %s200 = int_to_ptr.vmem [resolvable:$true] %s199
          %205 = dma.hbm_to_vmem [thread:$0]  %s198, 7680, %s200, %s187, 1920, 1920, 120
        $region28: #{tpu_custom_call.1} parent=19 // pred_fallthru
          _
      $region20: #{tpu_custom_call.1} parent=5 // pred_fallthru
        _
      %p206 = scmp.le.s32.totalorder 1, %s15
      %p207 = scmp.lt.s32.totalorder %s15, 3
      %p208 = pnand %p206, %p207
      %p209 = pneg %p208
      // Predicated region
      $region29: #{tpu_custom_call.1} parent=5 // pred_check
        _
      $region30: #{tpu_custom_call.1} parent=5 // pred_check_branch
        %211 = sbr.rel (%p208) target = $region32
      $region31: #{tpu_custom_call.1} parent=5 // pred_region
        %s212 = ssub.s32 %s15, 1
        %s213 = sand.u32 %s42, 1
        %s214 = scalar_lea.sflag [#allocation4], %s213
        %s215 = sand.u32 %s42, 1
        %s216 = smul.addr %s215, 480
        %s217 = scalar_lea.vmem [#allocation3], %s216
        // Predicated region
        $region33: #{tpu_custom_call.1} parent=31 // pred_check
          %p218 = pneg %p55
        $region34: #{tpu_custom_call.1} parent=31 // pred_check_branch
          %220 = sbr.rel (%p218) target = $region36
        $region35: #{tpu_custom_call.1} parent=31 // pred_region
          %221 = dma.done %s214, 7680
        $region36: #{tpu_custom_call.1} parent=31 // pred_fallthru
          _
        %s222 = sand.u32 %s20, 1
        %s223 = scalar_lea.sflag [#allocation6], %s222
        %s224 = sand.u32 %s70, 1
        %s225 = smul.addr %s224, 480
        %s226 = scalar_lea.vmem [#allocation5], %s225
        // Predicated region
        $region37: #{tpu_custom_call.1} parent=31 // pred_check
          %p227 = pneg %p83
        $region38: #{tpu_custom_call.1} parent=31 // pred_check_branch
          %229 = sbr.rel (%p227) target = $region40
        $region39: #{tpu_custom_call.1} parent=31 // pred_region
          %230 = dma.done %s223, 7680
        $region40: #{tpu_custom_call.1} parent=31 // pred_fallthru
          _
        // Predicated region
        $region41: #{tpu_custom_call.1} parent=31 // pred_check
          %p231 = pneg %p104
        $region42: #{tpu_custom_call.1} parent=31 // pred_check_branch
          %233 = sbr.rel (%p231) target = $region44
        $region43: #{tpu_custom_call.1} parent=31 // pred_region
          %234 = dma.done [#allocation6], 1920
        $region44: #{tpu_custom_call.1} parent=31 // pred_fallthru
          _
        %s235 = sand.u32 %s42, 1
        %s236 = scalar_lea.sflag [#allocation4], %s235
        %s237 = sand.u32 %s42, 1
        %s238 = smul.addr %s237, 480
        %s239 = scalar_lea.vmem [#allocation3], %s238
        %p240 = pneg %p55
        %p241 = pneg %p52
        %s242 = sand.u32 %s20, 1
        %s243 = scalar_lea.sflag [#allocation6], %s242
        %s244 = sand.u32 %s70, 1
        %s245 = smul.addr %s244, 480
        %s246 = scalar_lea.vmem [#allocation5], %s245
        %p247 = pneg %p83
        %p248 = pneg %p80
        %p249 = pneg %p104
        %p250 = pneg %p101
        %p251 = pneg %p130
        %p252 = pneg %p127
        %p253 = scmp.lt.s32.totalorder %s24, 1
        %s254 = scalar_select %p253, %s24, 1
        %s255 = scalar_lea.vmem %s3, %s254
        %s256 = sadd.s32 %s24, %s25
        %s257 = smul.u32 4, %s256
        %s258 = sadd.s32 %s24, %s25
        %s259 = smul.u32 4, %s258
        %p260 = scmp.lt.s32.totalorder %s24, 1
        %s261 = scalar_select %p260, %s24, 1
        %s262 = scalar_lea.vmem %s3, %s261
        %p263 = scmp.eq.s32.totalorder %s25, 0
        // Predicated region
        $region45: #{tpu_custom_call.1} parent=31 // pred_check
          %p264 = pneg %p263
        $region46: #{tpu_custom_call.1} parent=31 // pred_check_branch
          %266 = sbr.rel (%p264) target = $region48
        $region47: #{tpu_custom_call.1} parent=31 // pred_region
          %267 = vst [vmem:[#allocation2] sm:$0xff] 0.0
          %268 = vst [vmem:[#allocation2 + $0x8] sm:$0xff] 0.0
          %269 = vst [vmem:[#allocation2 + $0x10] sm:$0xff] 0.0
          %270 = vst [vmem:[#allocation2 + $0x18] sm:$0xff] 0.0
          %271 = vst [vmem:[#allocation2 + $0x20] sm:$0xff] 0.0
          %272 = vst [vmem:[#allocation2 + $0x28] sm:$0xff] 0.0
          %273 = vst [vmem:[#allocation2 + $0x30] sm:$0xff] 0.0
          %274 = vst [vmem:[#allocation2 + $0x38] sm:$0xff] 0.0
          %275 = vst [vmem:[#allocation2 + $0x40] sm:$0xff] 0.0
          %276 = vst [vmem:[#allocation2 + $0x48] sm:$0xff] 0.0
          %277 = vst [vmem:[#allocation2 + $0x50] sm:$0xff] 0.0
          %278 = vst [vmem:[#allocation2 + $0x58] sm:$0xff] 0.0
          %279 = vst [vmem:[#allocation2 + $0x60] sm:$0xff] 0.0
          %280 = vst [vmem:[#allocation2 + $0x68] sm:$0xff] 0.0
          %vm281 = vcmask 998400
          %282 = vst.msk [vmem:[#allocation2 + $0x70] sm:$0xff] %vm281, 0.0
        $region48: #{tpu_custom_call.1} parent=31 // pred_fallthru
          _
        loop: start=0, step=1, limit=4
        $region49: #{tpu_custom_call.1} parent=31 // loop_pre_header
          _
        $region50: #{tpu_custom_call.1} parent=31 // loop_header
          %s284 = sphi 0, %s288
          %p285 = scmp.ge.s32.totalorder %s284, 4
          %v289 = vphi 0.0, %v462
          %v290 = vphi 0.0, %v463
          %v291 = vphi 0.0, %v464
          %v292 = vphi 0.0, %v465
          %v293 = vphi 0.0, %v466
          %v294 = vphi 0.0, %v467
          %v295 = vphi 0.0, %v468
          %v296 = vphi 0.0, %v469
          %v297 = vphi 0.0, %v470
          %v298 = vphi 0.0, %v471
          %v299 = vphi 0.0, %v472
          %v300 = vphi 0.0, %v473
          %v301 = vphi 0.0, %v474
          %v302 = vphi 0.0, %v475
          %v303 = vphi 0.0, %v476
        $region51: #{tpu_custom_call.1} parent=31 // loop_header_branch
          %287 = sbr.rel (%p285) target = $region55
        $region52: #{tpu_custom_call.1} parent=31 // loop_body
          %s304 = smul.u32 %s284, 8
          %s305 = sshra.s32 %s304, 3
          %s306 = sand.u32 %s304, 7
          %s307 = smul.u32 %s305, 15
          %s308 = smul.addr %s307, 8
          %s309 = scalar_lea.vmem %s217, %s308 [#allocation3]
          %v310 = vld [vmem:[%s309] sm:$0xff]
          %v311 = vld [vmem:[%s309 + $0x8] sm:$0xff]
          %v312 = vld [vmem:[%s309 + $0x10] sm:$0xff]
          %v313 = vld [vmem:[%s309 + $0x18] sm:$0xff]
          %v314 = vld [vmem:[%s309 + $0x20] sm:$0xff]
          %v315 = vld [vmem:[%s309 + $0x28] sm:$0xff]
          %v316 = vld [vmem:[%s309 + $0x30] sm:$0xff]
          %v317 = vld [vmem:[%s309 + $0x38] sm:$0xff]
          %v318 = vld [vmem:[%s309 + $0x40] sm:$0xff]
          %v319 = vld [vmem:[%s309 + $0x48] sm:$0xff]
          %v320 = vld [vmem:[%s309 + $0x50] sm:$0xff]
          %v321 = vld [vmem:[%s309 + $0x58] sm:$0xff]
          %v322 = vld [vmem:[%s309 + $0x60] sm:$0xff]
          %v323 = vld [vmem:[%s309 + $0x68] sm:$0xff]
          %v324 = vld [vmem:[%s309 + $0x70] sm:$0xff]
          %s325 = smul.addr %s307, 8
          %s326 = scalar_lea.vmem %s226, %s325 [#allocation5]
          %v327 = vld [vmem:[%s326] sm:$0xff]
          %v328 = vld [vmem:[%s326 + $0x8] sm:$0xff]
          %v329 = vld [vmem:[%s326 + $0x10] sm:$0xff]
          %v330 = vld [vmem:[%s326 + $0x18] sm:$0xff]
          %v331 = vld [vmem:[%s326 + $0x20] sm:$0xff]
          %v332 = vld [vmem:[%s326 + $0x28] sm:$0xff]
          %v333 = vld [vmem:[%s326 + $0x30] sm:$0xff]
          %v334 = vld [vmem:[%s326 + $0x38] sm:$0xff]
          %v335 = vld [vmem:[%s326 + $0x40] sm:$0xff]
          %v336 = vld [vmem:[%s326 + $0x48] sm:$0xff]
          %v337 = vld [vmem:[%s326 + $0x50] sm:$0xff]
          %v338 = vld [vmem:[%s326 + $0x58] sm:$0xff]
          %v339 = vld [vmem:[%s326 + $0x60] sm:$0xff]
          %v340 = vld [vmem:[%s326 + $0x68] sm:$0xff]
          %v341 = vld [vmem:[%s326 + $0x70] sm:$0xff]
          %v342 = vsub.f32 %v310, %v327
          %v343 = vsub.f32 %v311, %v328
          %v344 = vsub.f32 %v312, %v329
          %v345 = vsub.f32 %v313, %v330
          %v346 = vsub.f32 %v314, %v331
          %v347 = vsub.f32 %v315, %v332
          %v348 = vsub.f32 %v316, %v333
          %v349 = vsub.f32 %v317, %v334
          %v350 = vsub.f32 %v318, %v335
          %v351 = vsub.f32 %v319, %v336
          %v352 = vsub.f32 %v320, %v337
          %v353 = vsub.f32 %v321, %v338
          %v354 = vsub.f32 %v322, %v339
          %v355 = vsub.f32 %v323, %v340
          %v356 = vsub.f32 %v324, %v341
          %372 = vrot.lane.b32.xlu0 %v342, 6
          %v373 = vpop.permute.xlu0 %372
          %374 = vrot.lane.b32.xlu0 %v343, 6
          %v375 = vpop.permute.xlu0 %374
          %376 = vrot.lane.b32.xlu0 %v344, 6
          %v377 = vpop.permute.xlu0 %376
          %378 = vrot.lane.b32.xlu0 %v345, 6
          %v379 = vpop.permute.xlu0 %378
          %380 = vrot.lane.b32.xlu0 %v346, 6
          %v381 = vpop.permute.xlu0 %380
          %382 = vrot.lane.b32.xlu0 %v347, 6
          %v383 = vpop.permute.xlu0 %382
          %384 = vrot.lane.b32.xlu0 %v348, 6
          %v385 = vpop.permute.xlu0 %384
          %386 = vrot.lane.b32.xlu0 %v349, 6
          %v387 = vpop.permute.xlu0 %386
          %388 = vrot.lane.b32.xlu0 %v350, 6
          %v389 = vpop.permute.xlu0 %388
          %390 = vrot.lane.b32.xlu0 %v351, 6
          %v391 = vpop.permute.xlu0 %390
          %392 = vrot.lane.b32.xlu0 %v352, 6
          %v393 = vpop.permute.xlu0 %392
          %394 = vrot.lane.b32.xlu0 %v353, 6
          %v395 = vpop.permute.xlu0 %394
          %396 = vrot.lane.b32.xlu0 %v354, 6
          %v397 = vpop.permute.xlu0 %396
          %398 = vrot.lane.b32.xlu0 %v355, 6
          %v399 = vpop.permute.xlu0 %398
          %400 = vrot.lane.b32.xlu0 %v356, 6
          %v401 = vpop.permute.xlu0 %400
          %vm402 = vcmask 48128
          %v403 = vsel %vm402, %v373, %v375
          %v404 = vsel %vm402, %v375, %v377
          %v405 = vsel %vm402, %v377, %v379
          %v406 = vsel %vm402, %v379, %v381
          %v407 = vsel %vm402, %v381, %v383
          %v408 = vsel %vm402, %v383, %v385
          %v409 = vsel %vm402, %v385, %v387
          %v410 = vsel %vm402, %v387, %v389
          %v411 = vsel %vm402, %v389, %v391
          %v412 = vsel %vm402, %v391, %v393
          %v413 = vsel %vm402, %v393, %v395
          %v414 = vsel %vm402, %v395, %v397
          %v415 = vsel %vm402, %v397, %v399
          %v416 = vsel %vm402, %v399, %v401
          %v432 = vsub.f32 %v342, %v373
          %v433 = vsub.f32 %v343, %v403
          %v434 = vsub.f32 %v344, %v404
          %v435 = vsub.f32 %v345, %v405
          %v436 = vsub.f32 %v346, %v406
          %v437 = vsub.f32 %v347, %v407
          %v438 = vsub.f32 %v348, %v408
          %v439 = vsub.f32 %v349, %v409
          %v440 = vsub.f32 %v350, %v410
          %v441 = vsub.f32 %v351, %v411
          %v442 = vsub.f32 %v352, %v412
          %v443 = vsub.f32 %v353, %v413
          %v444 = vsub.f32 %v354, %v414
          %v445 = vsub.f32 %v355, %v415
          %v446 = vsub.f32 %v356, %v416
          %v447 = vmul.f32 %v432, %v432
          %v448 = vmul.f32 %v433, %v433
          %v449 = vmul.f32 %v434, %v434
          %v450 = vmul.f32 %v435, %v435
          %v451 = vmul.f32 %v436, %v436
          %v452 = vmul.f32 %v437, %v437
          %v453 = vmul.f32 %v438, %v438
          %v454 = vmul.f32 %v439, %v439
          %v455 = vmul.f32 %v440, %v440
          %v456 = vmul.f32 %v441, %v441
          %v457 = vmul.f32 %v442, %v442
          %v458 = vmul.f32 %v443, %v443
          %v459 = vmul.f32 %v444, %v444
          %v460 = vmul.f32 %v445, %v445
          %v461 = vmul.f32 %v446, %v446
          %v462 = vadd.f32 %v289, %v447
          %v463 = vadd.f32 %v290, %v448
          %v464 = vadd.f32 %v291, %v449
          %v465 = vadd.f32 %v292, %v450
          %v466 = vadd.f32 %v293, %v451
          %v467 = vadd.f32 %v294, %v452
          %v468 = vadd.f32 %v295, %v453
          %v469 = vadd.f32 %v296, %v454
          %v470 = vadd.f32 %v297, %v455
          %v471 = vadd.f32 %v298, %v456
          %v472 = vadd.f32 %v299, %v457
          %v473 = vadd.f32 %v300, %v458
          %v474 = vadd.f32 %v301, %v459
          %v475 = vadd.f32 %v302, %v460
          %v476 = vadd.f32 %v303, %v461
        $region53: #{tpu_custom_call.1} parent=31 // loop_footer
          %s288 = sadd.s32 1, %s284
        $region54: #{tpu_custom_call.1} parent=31 // loop_footer_branch
          %283 = sbr.rel target = $region50
        $region55: #{tpu_custom_call.1} parent=31 // loop_exit
          _
        %v477 = vld [vmem:[#allocation2] sm:$0xff]
        %v478 = vld [vmem:[#allocation2 + $0x8] sm:$0xff]
        %v479 = vld [vmem:[#allocation2 + $0x10] sm:$0xff]
        %v480 = vld [vmem:[#allocation2 + $0x18] sm:$0xff]
        %v481 = vld [vmem:[#allocation2 + $0x20] sm:$0xff]
        %v482 = vld [vmem:[#allocation2 + $0x28] sm:$0xff]
        %v483 = vld [vmem:[#allocation2 + $0x30] sm:$0xff]
        %v484 = vld [vmem:[#allocation2 + $0x38] sm:$0xff]
        %v485 = vld [vmem:[#allocation2 + $0x40] sm:$0xff]
        %v486 = vld [vmem:[#allocation2 + $0x48] sm:$0xff]
        %v487 = vld [vmem:[#allocation2 + $0x50] sm:$0xff]
        %v488 = vld [vmem:[#allocation2 + $0x58] sm:$0xff]
        %v489 = vld [vmem:[#allocation2 + $0x60] sm:$0xff]
        %v490 = vld [vmem:[#allocation2 + $0x68] sm:$0xff]
        %v491 = vld [vmem:[#allocation2 + $0x70] sm:$0xff]
        %507 = vrot.lane.b32.xlu0 %v289, 122
        %v508 = vpop.permute.xlu0 %507
        %509 = vrot.lane.b32.xlu0 %v290, 122
        %v510 = vpop.permute.xlu0 %509
        %511 = vrot.lane.b32.xlu0 %v291, 122
        %v512 = vpop.permute.xlu0 %511
        %513 = vrot.lane.b32.xlu0 %v292, 122
        %v514 = vpop.permute.xlu0 %513
        %515 = vrot.lane.b32.xlu0 %v293, 122
        %v516 = vpop.permute.xlu0 %515
        %517 = vrot.lane.b32.xlu0 %v294, 122
        %v518 = vpop.permute.xlu0 %517
        %519 = vrot.lane.b32.xlu0 %v295, 122
        %v520 = vpop.permute.xlu0 %519
        %521 = vrot.lane.b32.xlu0 %v296, 122
        %v522 = vpop.permute.xlu0 %521
        %523 = vrot.lane.b32.xlu0 %v297, 122
        %v524 = vpop.permute.xlu0 %523
        %525 = vrot.lane.b32.xlu0 %v298, 122
        %v526 = vpop.permute.xlu0 %525
        %527 = vrot.lane.b32.xlu0 %v299, 122
        %v528 = vpop.permute.xlu0 %527
        %529 = vrot.lane.b32.xlu0 %v300, 122
        %v530 = vpop.permute.xlu0 %529
        %531 = vrot.lane.b32.xlu0 %v301, 122
        %v532 = vpop.permute.xlu0 %531
        %533 = vrot.lane.b32.xlu0 %v302, 122
        %v534 = vpop.permute.xlu0 %533
        %535 = vrot.lane.b32.xlu0 %v303, 122
        %v536 = vpop.permute.xlu0 %535
        %vm537 = vcmask 998400
        %v538 = vsel %vm537, %v508, %v510
        %v539 = vsel %vm537, %v510, %v512
        %v540 = vsel %vm537, %v512, %v514
        %v541 = vsel %vm537, %v514, %v516
        %v542 = vsel %vm537, %v516, %v518
        %v543 = vsel %vm537, %v518, %v520
        %v544 = vsel %vm537, %v520, %v522
        %v545 = vsel %vm537, %v522, %v524
        %v546 = vsel %vm537, %v524, %v526
        %v547 = vsel %vm537, %v526, %v528
        %v548 = vsel %vm537, %v528, %v530
        %v549 = vsel %vm537, %v530, %v532
        %v550 = vsel %vm537, %v532, %v534
        %v551 = vsel %vm537, %v534, %v536
        %v567 = vadd.f32 %v477, %v538
        %v568 = vadd.f32 %v478, %v539
        %v569 = vadd.f32 %v479, %v540
        %v570 = vadd.f32 %v480, %v541
        %v571 = vadd.f32 %v481, %v542
        %v572 = vadd.f32 %v482, %v543
        %v573 = vadd.f32 %v483, %v544
        %v574 = vadd.f32 %v484, %v545
        %v575 = vadd.f32 %v485, %v546
        %v576 = vadd.f32 %v486, %v547
        %v577 = vadd.f32 %v487, %v548
        %v578 = vadd.f32 %v488, %v549
        %v579 = vadd.f32 %v489, %v550
        %v580 = vadd.f32 %v490, %v551
        %v581 = vadd.f32 %v491, %v536
        %582 = vst [vmem:[#allocation2] sm:$0xff] %v567
        %583 = vst [vmem:[#allocation2 + $0x8] sm:$0xff] %v568
        %584 = vst [vmem:[#allocation2 + $0x10] sm:$0xff] %v569
        %585 = vst [vmem:[#allocation2 + $0x18] sm:$0xff] %v570
        %586 = vst [vmem:[#allocation2 + $0x20] sm:$0xff] %v571
        %587 = vst [vmem:[#allocation2 + $0x28] sm:$0xff] %v572
        %588 = vst [vmem:[#allocation2 + $0x30] sm:$0xff] %v573
        %589 = vst [vmem:[#allocation2 + $0x38] sm:$0xff] %v574
        %590 = vst [vmem:[#allocation2 + $0x40] sm:$0xff] %v575
        %591 = vst [vmem:[#allocation2 + $0x48] sm:$0xff] %v576
        %592 = vst [vmem:[#allocation2 + $0x50] sm:$0xff] %v577
        %593 = vst [vmem:[#allocation2 + $0x58] sm:$0xff] %v578
        %594 = vst [vmem:[#allocation2 + $0x60] sm:$0xff] %v579
        %595 = vst [vmem:[#allocation2 + $0x68] sm:$0xff] %v580
        %596 = vst.msk [vmem:[#allocation2 + $0x70] sm:$0xff] %vm537, %v581
        // Predicated region
        $region56: #{tpu_custom_call.1} parent=31 // pred_check
          %p597 = pneg %p263
        $region57: #{tpu_custom_call.1} parent=31 // pred_check_branch
          %599 = sbr.rel (%p597) target = $region59
        $region58: #{tpu_custom_call.1} parent=31 // pred_region
          %v600 = vld [vmem:[#allocation2] sm:$0xff]
          %v601 = vld [vmem:[#allocation2 + $0x8] sm:$0xff]
          %v602 = vld [vmem:[#allocation2 + $0x10] sm:$0xff]
          %v603 = vld [vmem:[#allocation2 + $0x18] sm:$0xff]
          %v604 = vld [vmem:[#allocation2 + $0x20] sm:$0xff]
          %v605 = vld [vmem:[#allocation2 + $0x28] sm:$0xff]
          %v606 = vld [vmem:[#allocation2 + $0x30] sm:$0xff]
          %v607 = vld [vmem:[#allocation2 + $0x38] sm:$0xff]
          %v608 = vld [vmem:[#allocation2 + $0x40] sm:$0xff]
          %v609 = vld [vmem:[#allocation2 + $0x48] sm:$0xff]
          %v610 = vld [vmem:[#allocation2 + $0x50] sm:$0xff]
          %v611 = vld [vmem:[#allocation2 + $0x58] sm:$0xff]
          %v612 = vld [vmem:[#allocation2 + $0x60] sm:$0xff]
          %v613 = vld [vmem:[#allocation2 + $0x68] sm:$0xff]
          %v614 = vld [vmem:[#allocation2 + $0x70] sm:$0xff]
          %v615 = vld [vmem:[#allocation7] sm:$0xff]
          %v616 = vld [vmem:[#allocation7 + $0x8] sm:$0xff]
          %v617 = vld [vmem:[#allocation7 + $0x10] sm:$0xff]
          %v618 = vld [vmem:[#allocation7 + $0x18] sm:$0xff]
          %v619 = vld [vmem:[#allocation7 + $0x20] sm:$0xff]
          %v620 = vld [vmem:[#allocation7 + $0x28] sm:$0xff]
          %v621 = vld [vmem:[#allocation7 + $0x30] sm:$0xff]
          %v622 = vld [vmem:[#allocation7 + $0x38] sm:$0xff]
          %v623 = vld [vmem:[#allocation7 + $0x40] sm:$0xff]
          %v624 = vld [vmem:[#allocation7 + $0x48] sm:$0xff]
          %v625 = vld [vmem:[#allocation7 + $0x50] sm:$0xff]
          %v626 = vld [vmem:[#allocation7 + $0x58] sm:$0xff]
          %v627 = vld [vmem:[#allocation7 + $0x60] sm:$0xff]
          %v628 = vld [vmem:[#allocation7 + $0x68] sm:$0xff]
          %v629 = vld [vmem:[#allocation7 + $0x70] sm:$0xff]
          %v630 = vmul.f32 %v600, %v615
          %v631 = vmul.f32 %v601, %v616
          %v632 = vmul.f32 %v602, %v617
          %v633 = vmul.f32 %v603, %v618
          %v634 = vmul.f32 %v604, %v619
          %v635 = vmul.f32 %v605, %v620
          %v636 = vmul.f32 %v606, %v621
          %v637 = vmul.f32 %v607, %v622
          %v638 = vmul.f32 %v608, %v623
          %v639 = vmul.f32 %v609, %v624
          %v640 = vmul.f32 %v610, %v625
          %v641 = vmul.f32 %v611, %v626
          %v642 = vmul.f32 %v612, %v627
          %v643 = vmul.f32 %v613, %v628
          %v644 = vmul.f32 %v614, %v629
          %v645 = vadd.f32 %v630, %v631
          %v646 = vadd.f32 %v645, %v632
          %v647 = vadd.f32 %v646, %v633
          %v648 = vadd.f32 %v647, %v634
          %v649 = vadd.f32 %v648, %v635
          %v650 = vadd.f32 %v649, %v636
          %v651 = vadd.f32 %v650, %v637
          %v652 = vadd.f32 %v651, %v638
          %v653 = vadd.f32 %v652, %v639
          %v654 = vadd.f32 %v653, %v640
          %v655 = vadd.f32 %v654, %v641
          %v656 = vadd.f32 %v655, %v642
          %v657 = vadd.f32 %v656, %v643
          %v658 = vsel %vm537, %v644, 0.0
          %v659 = vadd.f32 %v657, %v658
          %660 = vadd.xlane.f32.xlu0 %v659
          %v661 = vpop.xlane.xlu0 %660
          %v662 = vrot.slane %v661, 4
          %v663 = vadd.f32 %v661, %v662
          %v664 = vrot.slane %v663, 2
          %v665 = vadd.f32 %v663, %v664
          %v666 = vrot.slane %v665, 1
          %v667 = vadd.f32 %v665, %v666
          %s668 = vtos %v667
          %s669 = smul.f32 %s668, 0.041666668
          %v670 = vstv %s669
          %vm671 = vcmask 0
          %672 = vst.msk [vmem:[%s262] sm:$0x1] %vm671, %v670
        $region59: #{tpu_custom_call.1} parent=31 // pred_fallthru
          _
        %p673 = scmp.lt.s32.totalorder %s24, 1
        %s674 = scalar_select %p673, %s24, 1
        %s675 = scalar_lea.vmem %s3, %s674
        // Predicated region
        $region60: #{tpu_custom_call.1} parent=31 // pred_check
          %p676 = pneg %p127
        $region61: #{tpu_custom_call.1} parent=31 // pred_check_branch
          %678 = sbr.rel (%p676) target = $region63
        $region62: #{tpu_custom_call.1} parent=31 // pred_region
          _
        $region63: #{tpu_custom_call.1} parent=31 // pred_fallthru
          _
      $region32: #{tpu_custom_call.1} parent=5 // pred_fallthru
        _
      %p679 = scmp.le.s32.totalorder 2, %s15
      // Predicated region
      $region64: #{tpu_custom_call.1} parent=5 // pred_check
        %p680 = pneg %p679
      $region65: #{tpu_custom_call.1} parent=5 // pred_check_branch
        %682 = sbr.rel (%p680) target = $region67
      $region66: #{tpu_custom_call.1} parent=5 // pred_region
        %s683 = ssub.s32 %s15, 2
        // Predicated region
        $region68: #{tpu_custom_call.1} parent=66 // pred_check
          %p684 = pneg %p133
        $region69: #{tpu_custom_call.1} parent=66 // pred_check_branch
          %686 = sbr.rel (%p684) target = $region71
        $region70: #{tpu_custom_call.1} parent=66 // pred_region
          %p687 = scmp.lt.s32.totalorder %s26, 1
          %s688 = scalar_select %p687, %s26, 1
          %s689 = scalar_lea.vmem %s3, %s688
        $region71: #{tpu_custom_call.1} parent=66 // pred_fallthru
          _
      $region67: #{tpu_custom_call.1} parent=5 // pred_fallthru
        _
    $region6: #{tpu_custom_call.1} parent=1 // loop_footer
      %s19 = sadd.s32 1, %s15
    $region7: #{tpu_custom_call.1} parent=1 // loop_footer_branch
      %14 = sbr.rel target = $region3
    $region8: #{tpu_custom_call.1} parent=1 // loop_exit
      _
    %690 = vsyncpa [#allocation4], 1
    %s691 = scalar_lea.sflag [#allocation4], 1
    %692 = vsyncpa %s691, 1
    %693 = vsyncpa [#allocation6], 1
    %s694 = scalar_lea.sflag [#allocation6], 1
    %695 = vsyncpa %s694, 1

</llo_original>
